<compile_context>
chip_gen: v7x
topology: tpu7x:2x2x1
jax: 0.10.0
libtpu: 0.0.40
codegen_flags: <defaults>
</compile_context>

<pallas_src>
import functools

import jax
import jax.numpy as jnp
from jax.experimental import pallas as pl
from jax.experimental.pallas import tpu as pltpu

_LANE = 128

_ACT_FNS = {
    "relu": lambda x: jnp.maximum(x, 0.0),
    "sigmoid": jax.nn.sigmoid,
    "tanh": jnp.tanh,
    "exp": jnp.exp,
}
# Activations whose lowering hits the EUP (transcendental unit).
_TRANSCENDENTAL = {"sigmoid": 1, "tanh": 1, "exp": 1, "relu": 0}


def _ibp_activation_kernel(func, val_ref, lb_ref, ub_ref,
                           oval_ref, olb_ref, oub_ref):
    # Monotonic elementwise activation: apply to value and both endpoints.
    oval_ref[...] = func(val_ref[...])
    olb_ref[...] = func(lb_ref[...])
    oub_ref[...] = func(ub_ref[...])


def _choose_lane_width(n):
    """Largest of (1024, 512, 256, 128) dividing n (no padding needed),
    else fall back to 128 with zero padding up to the next multiple of 128."""
    for w in (1024, 512, 256, 128):
        if n % w == 0:
            return w, 0
    n_pad = ((n + _LANE - 1) // _LANE) * _LANE
    return _LANE, n_pad - n


def _choose_tile_rows(rows, lane_w, itemsize, target_tile_bytes):
    """Tile height: ~target_tile_bytes per ref, multiple of 32, ragged-grid ok."""
    tr = target_tile_bytes // (lane_w * itemsize)
    tr = max(32, (tr // 32) * 32)
    if rows <= tr:
        if rows >= 64:
            # Split into >= 2 grid steps so both v7x TensorCores get work.
            tr = (((rows + 1) // 2) + 31) // 32 * 32
        else:
            # Single block covering the full (possibly non-multiple-of-8) rows
            # dim; a full-extent block dim is always legal.
            tr = rows
    return tr


def ibp_activation(func_name, val, lb, ub, *,
                   target_tile_bytes=1 << 20, min_pallas_elems=65536):
    """Pallas equivalent of Activation.forward on an IntervalBoundedTensor.

    Returns (func(val), func(lb), func(ub)) with the same shape/dtype as inputs.
    """
    if func_name not in _ACT_FNS:
        raise ValueError(func_name)
    func = _ACT_FNS[func_name]

    orig_shape = val.shape
    dtype = val.dtype
    n = val.size

    # Small-input fast path: kernel launch + reshapes dwarf the actual work.
    if n < min_pallas_elems:
        return func(val), func(lb), func(ub)

    itemsize = jnp.dtype(dtype).itemsize
    lane_w, pad = _choose_lane_width(n)
    n_tot = n + pad
    rows = n_tot // lane_w

    def to_slab(x):
        if pad == 0:
            return x.reshape(rows, lane_w)
        x = jnp.ravel(x)
        x = jnp.pad(x, (0, pad))
        return x.reshape(rows, lane_w)

    def from_slab(x):
        if pad == 0:
            return x.reshape(orig_shape)
        return x.reshape(-1)[:n].reshape(orig_shape)

    val2, lb2, ub2 = to_slab(val), to_slab(lb), to_slab(ub)

    tr = _choose_tile_rows(rows, lane_w, itemsize, target_tile_bytes)
    grid = (pl.cdiv(rows, tr),)  # ragged last block handled by Pallas

    spec = pl.BlockSpec((tr, lane_w), lambda i: (i, 0))
    out_sds = jax.ShapeDtypeStruct((rows, lane_w), dtype)

    kernel = functools.partial(_ibp_activation_kernel, func)
    oval, olb, oub = pl.pallas_call(
        kernel,
        out_shape=(out_sds, out_sds, out_sds),
        grid_spec=pltpu.PrefetchScalarGridSpec(
            num_scalar_prefetch=0,
            grid=grid,
            in_specs=[spec, spec, spec],
            out_specs=[spec, spec, spec],
        ),
        compiler_params=pltpu.CompilerParams(
            dimension_semantics=("parallel",),
            # 6 refs x 2 buffers x ~1 MiB tiles ~= 12 MiB; give headroom but
            # stay at/below every generation's scoped/physical VMEM.
            vmem_limit_bytes=32 * 1024 * 1024,
        ),
        cost_estimate=pl.CostEstimate(
            flops=3 * n_tot,
            transcendentals=3 * n_tot * _TRANSCENDENTAL[func_name],
            bytes_accessed=6 * n_tot * itemsize,
        ),
    )(val2, lb2, ub2)

    return from_slab(oval), from_slab(olb), from_slab(oub)


if __name__ == "__main__":
    def make_ibp(shape, key):
        k1, k2 = jax.random.split(key)
        v = jax.random.normal(k1, shape, dtype=jnp.float32)
        eps = 0.1 * jnp.abs(jax.random.normal(k2, shape, dtype=jnp.float32))
        return v, v - eps, v + eps

    ok = True

    # 1) Module-consistent small NCHW example, forced through the Pallas path
    #    (min_pallas_elems=0) so the kernel itself is exercised.
    shape = (2, 4, 16, 16)
    val, lb, ub = make_ibp(shape, jax.random.PRNGKey(0))
    for name in ("relu", "sigmoid", "tanh", "exp"):
        oval, olb, oub = ibp_activation(name, val, lb, ub, min_pallas_elems=0)
        jax.block_until_ready((oval, olb, oub))
        ref = _ACT_FNS[name]
        ok &= bool(jnp.allclose(oval, ref(val), atol=1e-6))
        ok &= bool(jnp.allclose(olb, ref(lb), atol=1e-6))
        ok &= bool(jnp.allclose(oub, ref(ub), atol=1e-6))
        ok &= bool(jnp.all(olb <= oval + 1e-5)) and bool(jnp.all(oval <= oub + 1e-5))

    # 2) Default small-input fast path (matches module behaviour for tiny tensors).
    oval, olb, oub = ibp_activation("relu", val, lb, ub)
    jax.block_until_ready((oval, olb, oub))
    ok &= bool(jnp.allclose(oval, jnp.maximum(val, 0.0), atol=1e-6))

    # 3) Padded path (element count not a multiple of 128).
    shape = (2, 3, 7, 5)
    val, lb, ub = make_ibp(shape, jax.random.PRNGKey(1))
    oval, olb, oub = ibp_activation("sigmoid", val, lb, ub, min_pallas_elems=0)
    jax.block_until_ready((oval, olb, oub))
    ok &= bool(jnp.allclose(oval, jax.nn.sigmoid(val), atol=1e-6))
    ok &= bool(jnp.allclose(olb, jax.nn.sigmoid(lb), atol=1e-6))
    ok &= bool(jnp.allclose(oub, jax.nn.sigmoid(ub), atol=1e-6))

    # 4) Ragged multi-step grid (rows not a multiple of the tile height).
    shape = (2, 4, 128, 100)  # n = 102400 -> lane width 1024, rows = 100
    val, lb, ub = make_ibp(shape, jax.random.PRNGKey(2))
    oval, olb, oub = ibp_activation("tanh", val, lb, ub,
                                    min_pallas_elems=0,
                                    target_tile_bytes=128 * 1024)
    jax.block_until_ready((oval, olb, oub))
    ok &= bool(jnp.allclose(oval, jnp.tanh(val), atol=1e-6))
    ok &= bool(jnp.allclose(olb, jnp.tanh(lb), atol=1e-6))
    ok &= bool(jnp.allclose(oub, jnp.tanh(ub), atol=1e-6))

    if ok:
        print("KERNEL_OK")
    else:
        print("KERNEL_MISMATCH")
</pallas_src>

<mosaic_0001>
module attributes {stable_mosaic.version = 11 : i64} {
  func.func @_ibp_activation_kernel(%arg0: i32, %arg1: memref<2x1024xf32, #tpu.memory_space<vmem>>, %arg2: memref<2x1024xf32, #tpu.memory_space<vmem>>, %arg3: memref<2x1024xf32, #tpu.memory_space<vmem>>, %arg4: memref<2x1024xf32, #tpu.memory_space<vmem>>, %arg5: memref<2x1024xf32, #tpu.memory_space<vmem>>, %arg6: memref<2x1024xf32, #tpu.memory_space<vmem>>) attributes {dimension_semantics = [#tpu.dimension_semantics<parallel>], iteration_bounds = array<i64: 1>, scalar_prefetch = 0 : i64, scratch_operands = 0 : i64, tpu.core_type = #tpu.core_type<tc>, window_params = [{transform_indices = @transform_0, window_bounds = array<i64: 2, 1024>}, {transform_indices = @transform_1, window_bounds = array<i64: 2, 1024>}, {transform_indices = @transform_2, window_bounds = array<i64: 2, 1024>}, {transform_indices = @transform_3, window_bounds = array<i64: 2, 1024>}, {transform_indices = @transform_4, window_bounds = array<i64: 2, 1024>}, {transform_indices = @transform_5, window_bounds = array<i64: 2, 1024>}]} {
    %c0 = arith.constant 0 : index
    %c0_0 = arith.constant 0 : index
    %0 = vector.load %arg1[%c0, %c0_0] : memref<2x1024xf32, #tpu.memory_space<vmem>>, vector<2x1024xf32>
    %cst = arith.constant 0.000000e+00 : f32
    %1 = vector.broadcast %cst : f32 to vector<2x1024xf32>
    %2 = arith.maximumf %0, %1 : vector<2x1024xf32>
    %c0_1 = arith.constant 0 : index
    %c0_2 = arith.constant 0 : index
    %3 = vector.load %arg4[%c0_1, %c0_2] : memref<2x1024xf32, #tpu.memory_space<vmem>>, vector<2x1024xf32>
    tpu.vector_store %arg4[%c0_1, %c0_2], %2 {strides = array<i32>} : memref<2x1024xf32, #tpu.memory_space<vmem>>, vector<2x1024xf32>,
    %c0_3 = arith.constant 0 : index
    %c0_4 = arith.constant 0 : index
    %4 = vector.load %arg2[%c0_3, %c0_4] : memref<2x1024xf32, #tpu.memory_space<vmem>>, vector<2x1024xf32>
    %cst_5 = arith.constant 0.000000e+00 : f32
    %5 = vector.broadcast %cst_5 : f32 to vector<2x1024xf32>
    %6 = arith.maximumf %4, %5 : vector<2x1024xf32>
    %c0_6 = arith.constant 0 : index
    %c0_7 = arith.constant 0 : index
    %7 = vector.load %arg5[%c0_6, %c0_7] : memref<2x1024xf32, #tpu.memory_space<vmem>>, vector<2x1024xf32>
    tpu.vector_store %arg5[%c0_6, %c0_7], %6 {strides = array<i32>} : memref<2x1024xf32, #tpu.memory_space<vmem>>, vector<2x1024xf32>,
    %c0_8 = arith.constant 0 : index
    %c0_9 = arith.constant 0 : index
    %8 = vector.load %arg3[%c0_8, %c0_9] : memref<2x1024xf32, #tpu.memory_space<vmem>>, vector<2x1024xf32>
    %cst_10 = arith.constant 0.000000e+00 : f32
    %9 = vector.broadcast %cst_10 : f32 to vector<2x1024xf32>
    %10 = arith.maximumf %8, %9 : vector<2x1024xf32>
    %c0_11 = arith.constant 0 : index
    %c0_12 = arith.constant 0 : index
    %11 = vector.load %arg6[%c0_11, %c0_12] : memref<2x1024xf32, #tpu.memory_space<vmem>>, vector<2x1024xf32>
    tpu.vector_store %arg6[%c0_11, %c0_12], %10 {strides = array<i32>} : memref<2x1024xf32, #tpu.memory_space<vmem>>, vector<2x1024xf32>,
    return
  }
  func.func @transform_0(%arg0: i32) -> (i32, i32) {
    %c0_i32 = arith.constant 0 : i32
    %c0_i32_0 = arith.constant 0 : i32
    return %arg0, %c0_i32 : i32, i32
  }
  func.func @transform_1(%arg0: i32) -> (i32, i32) {
    %c0_i32 = arith.constant 0 : i32
    %c0_i32_0 = arith.constant 0 : i32
    return %arg0, %c0_i32 : i32, i32
  }
  func.func @transform_2(%arg0: i32) -> (i32, i32) {
    %c0_i32 = arith.constant 0 : i32
    %c0_i32_0 = arith.constant 0 : i32
    return %arg0, %c0_i32 : i32, i32
  }
  func.func @transform_3(%arg0: i32) -> (i32, i32) {
    %c0_i32 = arith.constant 0 : i32
    %c0_i32_0 = arith.constant 0 : i32
    return %arg0, %c0_i32 : i32, i32
  }
  func.func @transform_4(%arg0: i32) -> (i32, i32) {
    %c0_i32 = arith.constant 0 : i32
    %c0_i32_0 = arith.constant 0 : i32
    return %arg0, %c0_i32 : i32, i32
  }
  func.func @transform_5(%arg0: i32) -> (i32, i32) {
    %c0_i32 = arith.constant 0 : i32
    %c0_i32_0 = arith.constant 0 : i32
    return %arg0, %c0_i32 : i32, i32
  }
}

</mosaic_0001>

<llo_original>
// kernel: tpu_custom_call.1
$region0: #{tpu_custom_call.1}
  #allocation0 [shape = 'u32[]', space=smem, size = 0x4, offset = 0x4, fixed_abs, tag = 'smem constant byte address 0x4 - core index']
  #allocation1 [shape = 'u32[144,128]{1,0:T(1,128)}', space=vmem, size = 0x12000, scoped, tag = 'internal scratch']
  %s0 = inlined_call_operand.hbm [shape: f32[2,1024], index: 0, kind: input, shape index: {}]
  %s1 = inlined_call_operand.hbm [shape: f32[2,1024], index: 1, kind: input, shape index: {}]
  %s2 = inlined_call_operand.hbm [shape: f32[2,1024], index: 2, kind: input, shape index: {}]
  %s3 = inlined_call_operand.hbm [shape: f32[2,1024], index: 3, kind: output, shape index: {0}]
  %s4 = inlined_call_operand.hbm [shape: f32[2,1024], index: 4, kind: output, shape index: {1}]
  %s5 = inlined_call_operand.hbm [shape: f32[2,1024], index: 5, kind: output, shape index: {2}]
  %6 = xla_tuple %s3, %s4, %s5
  %s7 = sld [smem:[#allocation0]]
  $region50: #{tpu_custom_call.1} parent=0
    _
  %s9 = ssub.s32 1, %s7
  %s10 = scalar_select 0, %s9, %s7
  $region1: #{tpu_custom_call.1} parent=0
    #allocation2 [shape = 'u8[8192]{0}', space=vmem, size = 0x2000, scoped, tag = 'input window, operand 0, single buffered']
    #allocation3 [shape = 's32[1]{0}', space=sflag, size = 0x4, scoped, tag = 'scoped memory for tpu_custom_call.1']
    #allocation4 [shape = 's32[1]{0}', space=sflag, size = 0x4, scoped, tag = 'scoped memory for tpu_custom_call.1']
    #allocation5 [shape = 'u8[8192]{0}', space=vmem, size = 0x2000, scoped, tag = 'input window, operand 1, single buffered']
    #allocation6 [shape = 's32[1]{0}', space=sflag, size = 0x4, scoped, tag = 'scoped memory for tpu_custom_call.1']
    #allocation7 [shape = 'u8[8192]{0}', space=vmem, size = 0x2000, scoped, tag = 'input window, operand 2, single buffered']
    #allocation8 [shape = 'u8[8192]{0}', space=vmem, size = 0x2000, scoped, tag = 'output window, operand 0, single buffered']
    #allocation9 [shape = 'u8[8192]{0}', space=vmem, size = 0x2000, scoped, tag = 'output window, operand 1, single buffered']
    #allocation10 [shape = 's32[1]{0}', space=sflag, size = 0x4, scoped, tag = 'scoped memory for tpu_custom_call.1']
    #allocation11 [shape = 'u8[8192]{0}', space=vmem, size = 0x2000, scoped, tag = 'output window, operand 2, single buffered']
    %11 = vsyncpa [#allocation3], 0
    %12 = vsyncpa [#allocation6], 0
    %13 = vsyncpa [#allocation4], 0
    %14 = vsyncpa [#allocation10], 0
    // Predicated region
    $region2: #{tpu_custom_call.1} parent=1 // pred_check
      _
    $region3: #{tpu_custom_call.1} parent=1 // pred_check_branch
      %16 = sbr.rel (0) target = $region5
    $region4: #{tpu_custom_call.1} parent=1 // pred_region
      %s18 = ssub.s32 256, 256
      %19 = vsyncadd [#allocation3], %s18
      %s21 = sshll.u32 [#allocation2], 4
      %s22 = int_to_ptr.vmem [resolvable:$true] %s21
      %24 = dma.hbm_to_vmem [thread:$0]  %s0, 256, %s22, [#allocation3]
    $region5: #{tpu_custom_call.1} parent=1 // pred_fallthru
      _
    // Predicated region
    $region6: #{tpu_custom_call.1} parent=1 // pred_check
      _
    $region7: #{tpu_custom_call.1} parent=1 // pred_check_branch
      %26 = sbr.rel (0) target = $region9
    $region8: #{tpu_custom_call.1} parent=1 // pred_region
      %s28 = ssub.s32 256, 256
      %29 = vsyncadd [#allocation6], %s28
      %s31 = sshll.u32 [#allocation5], 4
      %s32 = int_to_ptr.vmem [resolvable:$true] %s31
      %34 = dma.hbm_to_vmem [thread:$0]  %s1, 256, %s32, [#allocation6]
    $region9: #{tpu_custom_call.1} parent=1 // pred_fallthru
      _
    // Predicated region
    $region10: #{tpu_custom_call.1} parent=1 // pred_check
      _
    $region11: #{tpu_custom_call.1} parent=1 // pred_check_branch
      %36 = sbr.rel (0) target = $region13
    $region12: #{tpu_custom_call.1} parent=1 // pred_region
      %s38 = ssub.s32 256, 256
      %39 = vsyncadd [#allocation6], %s38
      %s41 = sshll.u32 [#allocation7], 4
      %s42 = int_to_ptr.vmem [resolvable:$true] %s41
      %44 = dma.hbm_to_vmem [thread:$0]  %s2, 256, %s42, [#allocation6]
    $region13: #{tpu_custom_call.1} parent=1 // pred_fallthru
      _
    // Predicated region
    $region14: #{tpu_custom_call.1} parent=1 // pred_check
      _
    $region15: #{tpu_custom_call.1} parent=1 // pred_check_branch
      %46 = sbr.rel (0) target = $region17
    $region16: #{tpu_custom_call.1} parent=1 // pred_region
      %47 = dma.done [#allocation3], 256
    $region17: #{tpu_custom_call.1} parent=1 // pred_fallthru
      _
    // Predicated region
    $region18: #{tpu_custom_call.1} parent=1 // pred_check
      _
    $region19: #{tpu_custom_call.1} parent=1 // pred_check_branch
      %49 = sbr.rel (0) target = $region21
    $region20: #{tpu_custom_call.1} parent=1 // pred_region
      %50 = dma.done [#allocation6], 256
    $region21: #{tpu_custom_call.1} parent=1 // pred_fallthru
      _
    // Predicated region
    $region22: #{tpu_custom_call.1} parent=1 // pred_check
      _
    $region23: #{tpu_custom_call.1} parent=1 // pred_check_branch
      %52 = sbr.rel (0) target = $region25
    $region24: #{tpu_custom_call.1} parent=1 // pred_region
      %53 = dma.done [#allocation6], 256
    $region25: #{tpu_custom_call.1} parent=1 // pred_fallthru
      _
    %v54 = vld [vmem:[#allocation2] sm:$0xff]
    %v55 = vld [vmem:[#allocation2 + $0x8] sm:$0xff]
    %v56 = vmax.f32 %v54, 0.0
    %v57 = vmax.f32 %v55, 0.0
    %58 = vst [vmem:[#allocation8] sm:$0xff] %v56
    %59 = vst [vmem:[#allocation8 + $0x8] sm:$0xff] %v57
    %v60 = vld [vmem:[#allocation5] sm:$0xff]
    %v61 = vld [vmem:[#allocation5 + $0x8] sm:$0xff]
    %v62 = vmax.f32 %v60, 0.0
    %v63 = vmax.f32 %v61, 0.0
    %64 = vst [vmem:[#allocation9] sm:$0xff] %v62
    %65 = vst [vmem:[#allocation9 + $0x8] sm:$0xff] %v63
    %v66 = vld [vmem:[#allocation7] sm:$0xff]
    %v67 = vld [vmem:[#allocation7 + $0x8] sm:$0xff]
    %v68 = vmax.f32 %v66, 0.0
    %v69 = vmax.f32 %v67, 0.0
    %70 = vst [vmem:[#allocation11] sm:$0xff] %v68
    %71 = vst [vmem:[#allocation11 + $0x8] sm:$0xff] %v69
    // Predicated region
    $region26: #{tpu_custom_call.1} parent=1 // pred_check
      _
    $region27: #{tpu_custom_call.1} parent=1 // pred_check_branch
      %73 = sbr.rel (0) target = $region29
    $region28: #{tpu_custom_call.1} parent=1 // pred_region
      %s75 = ssub.s32 256, 256
      %76 = vsyncadd [#allocation4], %s75
      %s78 = sshll.u32 [#allocation8], 4
      %s79 = int_to_ptr.vmem [resolvable:$true] %s78
      %81 = dma.vmem_to_hbm [thread:$0]  %s79, 256, %s3, [#allocation4]
    $region29: #{tpu_custom_call.1} parent=1 // pred_fallthru
      _
    // Predicated region
    $region30: #{tpu_custom_call.1} parent=1 // pred_check
      _
    $region31: #{tpu_custom_call.1} parent=1 // pred_check_branch
      %83 = sbr.rel (0) target = $region33
    $region32: #{tpu_custom_call.1} parent=1 // pred_region
      %s85 = ssub.s32 256, 256
      %86 = vsyncadd [#allocation10], %s85
      %s88 = sshll.u32 [#allocation9], 4
      %s89 = int_to_ptr.vmem [resolvable:$true] %s88
      %91 = dma.vmem_to_hbm [thread:$0]  %s89, 256, %s4, [#allocation10]
    $region33: #{tpu_custom_call.1} parent=1 // pred_fallthru
      _
    // Predicated region
    $region34: #{tpu_custom_call.1} parent=1 // pred_check
      _
    $region35: #{tpu_custom_call.1} parent=1 // pred_check_branch
      %93 = sbr.rel (0) target = $region37
    $region36: #{tpu_custom_call.1} parent=1 // pred_region
      %s95 = ssub.s32 256, 256
      %96 = vsyncadd [#allocation10], %s95
      %s98 = sshll.u32 [#allocation11], 4
      %s99 = int_to_ptr.vmem [resolvable:$true] %s98
      %101 = dma.vmem_to_hbm [thread:$0]  %s99, 256, %s5, [#allocation10]
    $region37: #{tpu_custom_call.1} parent=1 // pred_fallthru
      _
    // Predicated region
    $region38: #{tpu_custom_call.1} parent=1 // pred_check
      _
    $region39: #{tpu_custom_call.1} parent=1 // pred_check_branch
      %103 = sbr.rel (0) target = $region41
    $region40: #{tpu_custom_call.1} parent=1 // pred_region
      %104 = dma.done [#allocation4], 256
    $region41: #{tpu_custom_call.1} parent=1 // pred_fallthru
      _
    // Predicated region
    $region42: #{tpu_custom_call.1} parent=1 // pred_check
      _
    $region43: #{tpu_custom_call.1} parent=1 // pred_check_branch
      %106 = sbr.rel (0) target = $region45
    $region44: #{tpu_custom_call.1} parent=1 // pred_region
      %107 = dma.done [#allocation10], 256
    $region45: #{tpu_custom_call.1} parent=1 // pred_fallthru
      _
    // Predicated region
    $region46: #{tpu_custom_call.1} parent=1 // pred_check
      _
    $region47: #{tpu_custom_call.1} parent=1 // pred_check_branch
      %109 = sbr.rel (0) target = $region49
    $region48: #{tpu_custom_call.1} parent=1 // pred_region
      %110 = dma.done [#allocation10], 256
    $region49: #{tpu_custom_call.1} parent=1 // pred_fallthru
      _
    %111 = vsyncpa [#allocation3], 1
    %112 = vsyncpa [#allocation6], 1
    %113 = vsyncpa [#allocation4], 1
    %114 = vsyncpa [#allocation10], 1

</llo_original>
